<compile_context>
chip_gen: v7x
topology: tpu7x:2x2x1
jax: 0.10.0
libtpu: 0.0.40
codegen_flags: <defaults>
</compile_context>

<pallas_src>
import math
import functools

import jax
import jax.numpy as jnp
from jax import lax
from jax.experimental import pallas as pl
from jax.experimental.pallas import tpu as pltpu


MXU_DTYPE = jnp.bfloat16            # matmul operand / inter-kernel activation dtype
LN_EPS = 1e-6


def _vmem_capacity_bytes():
    try:
        info = pltpu.get_tpu_info()
        return int(getattr(info, "vmem_capacity_bytes", 128 * 1024 * 1024))
    except Exception:
        return 128 * 1024 * 1024


_VMEM_CAP = _vmem_capacity_bytes()
_SMALL_VMEM = _VMEM_CAP <= 64 * 1024 * 1024          # v7x-class chip
VMEM_LIMIT_BYTES = (40 if _SMALL_VMEM else 48) * 1024 * 1024
LN_REDUCE_TILE = 256 if _SMALL_VMEM else 512          # tk / tf in the fused-LN kernels


def _pick_tile(dim, target, mult):
    """Largest tile <= target that divides `dim` and is a multiple of `mult`;
    falls back to the full dimension (always a legal BlockSpec)."""
    if dim <= target:
        return dim
    t = (target // mult) * mult
    while t >= mult:
        if dim % t == 0:
            return t
        t -= mult
    return dim


# ----------------------------------------------------------------------------
# Kernel 1: tiled GEMM (+ bias, optional ReLU)   grid = (M/tm, N/tn, K/tk)
# ----------------------------------------------------------------------------
def _matmul_kernel(x_ref, w_ref, b_ref, o_ref, acc_ref, *, activation):
    k = pl.program_id(2)

    @pl.when(k == 0)
    def _():
        acc_ref[...] = jnp.zeros_like(acc_ref)

    acc_ref[...] += jnp.dot(
        x_ref[...].astype(MXU_DTYPE), w_ref[...].astype(MXU_DTYPE),
        preferred_element_type=jnp.float32)

    @pl.when(k == pl.num_programs(2) - 1)
    def _():
        y = acc_ref[...] + b_ref[...].astype(jnp.float32)
        if activation == "relu":
            y = jnp.maximum(y, 0.0)
        o_ref[...] = y.astype(o_ref.dtype)


def matmul(x, w, b, activation=None, *, tm=512, tn=512, tk=512,
           out_dtype=MXU_DTYPE):
    """x: (M, K), w: (K, N) bf16, b: (N,) f32 -> (M, N) bf16 (f32 accumulation)."""
    M, K = x.shape
    N = w.shape[1]
    tm = _pick_tile(M, tm, 8)
    tn = _pick_tile(N, tn, 128)
    tk = _pick_tile(K, tk, 128)
    grid = (M // tm, N // tn, K // tk)
    return pl.pallas_call(
        functools.partial(_matmul_kernel, activation=activation),
        grid=grid,
        in_specs=[
            pl.BlockSpec((tm, tk), lambda i, j, k: (i, k)),
            pl.BlockSpec((tk, tn), lambda i, j, k: (k, j)),
            pl.BlockSpec((1, tn), lambda i, j, k: (0, j)),
        ],
        out_specs=pl.BlockSpec((tm, tn), lambda i, j, k: (i, j)),
        out_shape=jax.ShapeDtypeStruct((M, N), out_dtype),
        scratch_shapes=[pltpu.VMEM((tm, tn), jnp.float32)],
        compiler_params=pltpu.CompilerParams(
            dimension_semantics=("parallel", "parallel", "arbitrary"),
            vmem_limit_bytes=VMEM_LIMIT_BYTES),
    )(x, w, b.reshape(1, N))


# ----------------------------------------------------------------------------
# Kernel 2: fused GEMM + bias + residual + LayerNorm   grid = (M/tm, K/tk)
#           (N = full output dim: LayerNorm needs the whole feature axis)
# ----------------------------------------------------------------------------
def _matmul_resid_ln_kernel(x_ref, w_ref, b_ref, r_ref, g_ref, beta_ref,
                            o_ref, acc_ref, *, eps):
    k = pl.program_id(1)

    @pl.when(k == 0)
    def _():
        acc_ref[...] = jnp.zeros_like(acc_ref)

    acc_ref[...] += jnp.dot(
        x_ref[...].astype(MXU_DTYPE), w_ref[...].astype(MXU_DTYPE),
        preferred_element_type=jnp.float32)

    @pl.when(k == pl.num_programs(1) - 1)
    def _():
        y = acc_ref[...] + b_ref[...] + r_ref[...].astype(jnp.float32)
        mu = jnp.mean(y, axis=-1, keepdims=True)
        var = jnp.mean(jnp.square(y - mu), axis=-1, keepdims=True)
        yn = (y - mu) * lax.rsqrt(var + eps)
        o_ref[...] = (yn * g_ref[...] + beta_ref[...]).astype(o_ref.dtype)


def matmul_resid_ln(x, w, b, resid, gamma, beta, *, eps=LN_EPS,
                    tm=256, tk=None, out_dtype=MXU_DTYPE):
    """LayerNorm(x @ w + b + resid).  x: (M, K), w: (K, N), resid: (M, N)."""
    M, K = x.shape
    N = w.shape[1]
    tm = _pick_tile(M, tm, 8)
    tk = _pick_tile(K, LN_REDUCE_TILE if tk is None else tk, 128)
    grid = (M // tm, K // tk)
    return pl.pallas_call(
        functools.partial(_matmul_resid_ln_kernel, eps=eps),
        grid=grid,
        in_specs=[
            pl.BlockSpec((tm, tk), lambda i, k: (i, k)),
            pl.BlockSpec((tk, N), lambda i, k: (k, 0)),
            pl.BlockSpec((1, N), lambda i, k: (0, 0)),
            pl.BlockSpec((tm, N), lambda i, k: (i, 0)),
            pl.BlockSpec((1, N), lambda i, k: (0, 0)),
            pl.BlockSpec((1, N), lambda i, k: (0, 0)),
        ],
        out_specs=pl.BlockSpec((tm, N), lambda i, k: (i, 0)),
        out_shape=jax.ShapeDtypeStruct((M, N), out_dtype),
        scratch_shapes=[pltpu.VMEM((tm, N), jnp.float32)],
        compiler_params=pltpu.CompilerParams(
            dimension_semantics=("parallel", "arbitrary"),
            vmem_limit_bytes=VMEM_LIMIT_BYTES),
    )(x, w, b.reshape(1, N), resid, gamma.reshape(1, N), beta.reshape(1, N))


# ----------------------------------------------------------------------------
# Kernel 3: fused FFN  LN(relu(x@w1+b1) @ w2 + b2 + resid)   grid = (M/tm, dff/tf)
# ----------------------------------------------------------------------------
def _ffn_kernel(x_ref, w1_ref, b1_ref, w2_ref, b2_ref, r_ref, g_ref, beta_ref,
                o_ref, acc_ref, *, eps):
    f = pl.program_id(1)

    @pl.when(f == 0)
    def _():
        acc_ref[...] = jnp.zeros_like(acc_ref)

    h = jnp.dot(x_ref[...].astype(MXU_DTYPE), w1_ref[...].astype(MXU_DTYPE),
                preferred_element_type=jnp.float32)
    # bf16 immediately after bias+ReLU -> halves the intermediate ld/st width
    h = jnp.maximum(h + b1_ref[...], 0.0).astype(MXU_DTYPE)
    acc_ref[...] += jnp.dot(h, w2_ref[...].astype(MXU_DTYPE),
                            preferred_element_type=jnp.float32)

    @pl.when(f == pl.num_programs(1) - 1)
    def _():
        y = acc_ref[...] + b2_ref[...] + r_ref[...].astype(jnp.float32)
        mu = jnp.mean(y, axis=-1, keepdims=True)
        var = jnp.mean(jnp.square(y - mu), axis=-1, keepdims=True)
        yn = (y - mu) * lax.rsqrt(var + eps)
        o_ref[...] = (yn * g_ref[...] + beta_ref[...]).astype(o_ref.dtype)


def ffn_resid_ln(x, w1, b1, w2, b2, resid, gamma, beta, *, eps=LN_EPS,
                 tm=256, tf=None, out_dtype=MXU_DTYPE):
    M, D = x.shape
    F = w1.shape[1]
    tm = _pick_tile(M, tm, 8)
    tf = _pick_tile(F, LN_REDUCE_TILE if tf is None else tf, 128)
    grid = (M // tm, F // tf)
    return pl.pallas_call(
        functools.partial(_ffn_kernel, eps=eps),
        grid=grid,
        in_specs=[
            pl.BlockSpec((tm, D), lambda i, f: (i, 0)),
            pl.BlockSpec((D, tf), lambda i, f: (0, f)),
            pl.BlockSpec((1, tf), lambda i, f: (0, f)),
            pl.BlockSpec((tf, D), lambda i, f: (f, 0)),
            pl.BlockSpec((1, D), lambda i, f: (0, 0)),
            pl.BlockSpec((tm, D), lambda i, f: (i, 0)),
            pl.BlockSpec((1, D), lambda i, f: (0, 0)),
            pl.BlockSpec((1, D), lambda i, f: (0, 0)),
        ],
        out_specs=pl.BlockSpec((tm, D), lambda i, f: (i, 0)),
        out_shape=jax.ShapeDtypeStruct((M, D), out_dtype),
        scratch_shapes=[pltpu.VMEM((tm, D), jnp.float32)],
        compiler_params=pltpu.CompilerParams(
            dimension_semantics=("parallel", "arbitrary"),
            vmem_limit_bytes=VMEM_LIMIT_BYTES),
    )(x, w1, b1.reshape(1, F), w2, b2.reshape(1, D), resid,
      gamma.reshape(1, D), beta.reshape(1, D))


# ----------------------------------------------------------------------------
# Kernel 4: scaled-dot-product attention, tiled over (batch, head, Sq-blocks)
# ----------------------------------------------------------------------------
def _attn_kernel(*refs, scale, mask_mode):
    if mask_mode == "none":
        q_ref, k_ref, v_ref, o_ref, w_ref = refs
        m_ref = None
    else:
        q_ref, k_ref, v_ref, m_ref, o_ref, w_ref = refs

    q = q_ref[0, 0].astype(MXU_DTYPE)            # (tq, depth)
    k = k_ref[0, 0].astype(MXU_DTYPE)            # (Sk, depth)
    v = v_ref[0, 0].astype(MXU_DTYPE)            # (Sk, depth)

    # NOTE: QK^T contracts only `depth`; choose depth >= 128 in real configs to
    # fill the 256-deep v6e/v7x MXU.  PV (contraction = Sk) is already efficient.
    scores = lax.dot_general(
        q, k, dimension_numbers=(((1,), (1,)), ((), ())),
        preferred_element_type=jnp.float32) * scale          # (tq, Sk)

    if m_ref is not None:
        # mask convention matches the reference: 1 = masked -> +(-1e10)
        scores = scores + m_ref[0].astype(jnp.float32) * (-1e10)

    mmax = jnp.max(scores, axis=-1, keepdims=True)
    p = jnp.exp(scores - mmax)
    denom = jnp.sum(p, axis=-1, keepdims=True)
    attn = p / denom                                         # exact softmax

    w_ref[0, 0] = attn.astype(w_ref.dtype)
    out = jnp.dot(attn.astype(MXU_DTYPE), v, preferred_element_type=jnp.float32)
    o_ref[0, 0] = out.astype(o_ref.dtype)


def sdpa(q, k, v, mask=None, *, tq=256, out_dtype=MXU_DTYPE,
         weights_dtype=jnp.bfloat16):
    """q: (B, H, Sq, depth), k/v: (B, H, Sk, depth).
    mask: None, (B, Sk) padding mask (reference semantics), or (B, Sq, Sk)
    per-query mask (e.g. causal look-ahead). 1 = masked."""
    B, H, Sq, depth = q.shape
    Sk = k.shape[2]
    scale = 1.0 / math.sqrt(depth)
    tq = _pick_tile(Sq, tq, 8)
    grid = (B, H, Sq // tq)

    in_specs = [
        pl.BlockSpec((1, 1, tq, depth), lambda b, h, i: (b, h, i, 0)),
        pl.BlockSpec((1, 1, Sk, depth), lambda b, h, i: (b, h, 0, 0)),
        pl.BlockSpec((1, 1, Sk, depth), lambda b, h, i: (b, h, 0, 0)),
    ]
    args = [q, k, v]
    if mask is None:
        mask_mode = "none"
    elif mask.ndim == 2:                      # (B, Sk): broadcast over heads & queries
        mask_mode = "kv"
        in_specs.append(pl.BlockSpec((1, 1, Sk), lambda b, h, i: (b, 0, 0)))
        args.append(mask.astype(jnp.float32).reshape(B, 1, Sk))
    else:                                     # (B, Sq, Sk): per-query (causal) mask
        mask_mode = "per_query"
        in_specs.append(pl.BlockSpec((1, tq, Sk), lambda b, h, i: (b, i, 0)))
        args.append(mask.astype(jnp.float32).reshape(B, Sq, Sk))

    out, attn_w = pl.pallas_call(
        functools.partial(_attn_kernel, scale=scale, mask_mode=mask_mode),
        grid=grid,
        in_specs=in_specs,
        out_specs=[
            pl.BlockSpec((1, 1, tq, depth), lambda b, h, i: (b, h, i, 0)),
            pl.BlockSpec((1, 1, tq, Sk), lambda b, h, i: (b, h, i, 0)),
        ],
        out_shape=[
            jax.ShapeDtypeStruct((B, H, Sq, depth), out_dtype),
            jax.ShapeDtypeStruct((B, H, Sq, Sk), weights_dtype),
        ],
        compiler_params=pltpu.CompilerParams(
            dimension_semantics=("parallel", "parallel", "parallel"),
            vmem_limit_bytes=VMEM_LIMIT_BYTES),
    )(*args)
    return out, attn_w


# ----------------------------------------------------------------------------
# Module glue
# ----------------------------------------------------------------------------
def _split_heads(x2d, B, S, H, depth):
    # same layout transform as the reference split_head (done once, outside kernels)
    return x2d.reshape(B, S, H, depth).transpose(0, 2, 1, 3)


def mha_attention(p, value, key, query, num_heads, mask=None):
    """Projections + scaled-dot-product attention.  Returns the head-concatenated
    context (B, Sq, hidden) and attention weights (B, H, Sq, Sk).  The output
    dense is fused with residual+LayerNorm at the layer level."""
    B, Sq, d_model = query.shape
    hidden = p["dense_w"].shape[0]
    depth = hidden // num_heads

    if (query is key) and (key is value):
        # self-attention: one fused QKV GEMM
        qkv = matmul(query.reshape(B * Sq, d_model), p["wqkv_w"], p["wqkv_b"])
        q = _split_heads(qkv[:, :hidden], B, Sq, num_heads, depth)
        k = _split_heads(qkv[:, hidden:2 * hidden], B, Sq, num_heads, depth)
        v = _split_heads(qkv[:, 2 * hidden:], B, Sq, num_heads, depth)
    else:
        Sk = key.shape[1]
        qp = matmul(query.reshape(B * Sq, d_model), p["wq_w"], p["wq_b"])
        q = _split_heads(qp, B, Sq, num_heads, depth)
        if key is value:
            # cross-attention: one fused K|V GEMM over enc_output
            kv = matmul(key.reshape(B * Sk, d_model), p["wkv_w"], p["wkv_b"])
            k = _split_heads(kv[:, :hidden], B, Sk, num_heads, depth)
            v = _split_heads(kv[:, hidden:], B, Sk, num_heads, depth)
        else:
            # general fallback: separate K / V GEMMs (no wasted packed GEMMs)
            Sv = value.shape[1]
            kp = matmul(key.reshape(B * Sk, d_model), p["wk_w"], p["wk_b"])
            vp = matmul(value.reshape(B * Sv, d_model), p["wv_w"], p["wv_b"])
            k = _split_heads(kp, B, Sk, num_heads, depth)
            v = _split_heads(vp, B, Sv, num_heads, depth)

    ctx, attn_w = sdpa(q, k, v, mask)
    ctx = ctx.transpose(0, 2, 1, 3).reshape(B, Sq, hidden)   # concat_attention layout
    return ctx, attn_w


def decoder_layer_forward(p, x, enc_output, look_ahead_mask, padding_mask, num_heads):
    B, S, D = x.shape
    M = B * S
    # block 1: self-attention -> fused dense + residual + LN
    ctx1, w1 = mha_attention(p["mha1"], x, x, x, num_heads, look_ahead_mask)
    out1 = matmul_resid_ln(
        ctx1.reshape(M, ctx1.shape[-1]), p["mha1"]["dense_w"], p["mha1"]["dense_b"],
        x.reshape(M, D), p["ln1_g"], p["ln1_b"]).reshape(B, S, D)
    # block 2: cross-attention -> fused dense + residual + LN
    ctx2, w2 = mha_attention(p["mha2"], enc_output, enc_output, out1, num_heads,
                             padding_mask)
    out2 = matmul_resid_ln(
        ctx2.reshape(M, ctx2.shape[-1]), p["mha2"]["dense_w"], p["mha2"]["dense_b"],
        out1.reshape(M, D), p["ln2_g"], p["ln2_b"]).reshape(B, S, D)
    # fused FFN + residual + LN
    out3 = ffn_resid_ln(
        out2.reshape(M, D), p["ffn"]["w1"], p["ffn"]["b1"],
        p["ffn"]["w2"], p["ffn"]["b2"], out2.reshape(M, D),
        p["ln3_g"], p["ln3_b"]).reshape(B, S, D)
    return out3, w1, w2


def decoder_forward(params, tokens, enc_output, look_ahead_mask=None, padding_mask=None):
    d_model = params["embedding"].shape[1]
    # TODO(synk): embedding gather + positional add left to XLA (data-dependent gather).
    x = jnp.take(params["embedding"], tokens, axis=0) * math.sqrt(d_model)
    S = tokens.shape[1]
    x = x + params["pos_encoding"][:S][None, :, :]          # dropout = identity
    x = x.astype(MXU_DTYPE)                                 # bf16 residual stream
    enc_output = enc_output.astype(MXU_DTYPE)
    attention_weights = {}
    for i, lp in enumerate(params["layers"]):
        x, b1, b2 = decoder_layer_forward(
            lp, x, enc_output, look_ahead_mask, padding_mask, params["num_heads"])
        attention_weights[f"decoder_layer{i + 1}_block1"] = b1
        attention_weights[f"decoder_layer{i + 1}_block2"] = b2
    return x, attention_weights


# ----------------------------------------------------------------------------
# Deterministic parameter initialization (weights stored bf16, rest f32)
# ----------------------------------------------------------------------------
def _init_linear(key, din, dout):
    kw, kb = jax.random.split(key)
    bound = 1.0 / math.sqrt(din)
    w = jax.random.uniform(kw, (din, dout), jnp.float32, -bound, bound)
    b = jax.random.uniform(kb, (dout,), jnp.float32, -bound, bound)
    return w, b


def _init_mha(key, d_model, hidden):
    ks = jax.random.split(key, 4)
    wq_w, wq_b = _init_linear(ks[0], d_model, hidden)
    wk_w, wk_b = _init_linear(ks[1], d_model, hidden)
    wv_w, wv_b = _init_linear(ks[2], d_model, hidden)
    dn_w, dn_b = _init_linear(ks[3], hidden, d_model)
    return {
        "wq_w": wq_w.astype(MXU_DTYPE), "wq_b": wq_b,
        "wk_w": wk_w.astype(MXU_DTYPE), "wk_b": wk_b,
        "wv_w": wv_w.astype(MXU_DTYPE), "wv_b": wv_b,
        "wkv_w": jnp.concatenate([wk_w, wv_w], axis=1).astype(MXU_DTYPE),
        "wkv_b": jnp.concatenate([wk_b, wv_b], axis=0),
        "wqkv_w": jnp.concatenate([wq_w, wk_w, wv_w], axis=1).astype(MXU_DTYPE),
        "wqkv_b": jnp.concatenate([wq_b, wk_b, wv_b], axis=0),
        "dense_w": dn_w.astype(MXU_DTYPE), "dense_b": dn_b,
    }


def _init_decoder_layer(key, d_model, num_heads, dff, mha_hidden):
    hidden = d_model if mha_hidden is None else mha_hidden
    ks = jax.random.split(key, 4)
    w1, b1 = _init_linear(ks[2], d_model, dff)
    w2, b2 = _init_linear(ks[3], dff, d_model)
    return {
        "mha1": _init_mha(ks[0], d_model, hidden),
        "mha2": _init_mha(ks[1], d_model, hidden),
        "ffn": {"w1": w1.astype(MXU_DTYPE), "b1": b1,
                "w2": w2.astype(MXU_DTYPE), "b2": b2},
        "ln1_g": jnp.ones((d_model,), jnp.float32),
        "ln1_b": jnp.zeros((d_model,), jnp.float32),
        "ln2_g": jnp.ones((d_model,), jnp.float32),
        "ln2_b": jnp.zeros((d_model,), jnp.float32),
        "ln3_g": jnp.ones((d_model,), jnp.float32),
        "ln3_b": jnp.zeros((d_model,), jnp.float32),
    }


def _sinusoidal_pe(max_len, d_model):
    pos = jnp.arange(max_len, dtype=jnp.float32)[:, None]
    i = jnp.arange(d_model, dtype=jnp.float32)[None, :]
    angle = pos / jnp.power(10000.0, (2.0 * jnp.floor(i / 2.0)) / d_model)
    even = (jnp.arange(d_model)[None, :] % 2) == 0
    return jnp.where(even, jnp.sin(angle), jnp.cos(angle))


def init_decoder(key, num_layers, d_model, num_heads, dff, mha_hidden=None,
                 target_vocab_size=1000, maximum_position_encoding=5000):
    # NOTE: for real configs keep d_model, hidden (=H*depth), dff multiples of 128
    # (lane-dense outputs); the demo's d_model=32 is only a smoke test.
    keys = jax.random.split(key, num_layers + 1)
    return {
        "embedding": jax.random.normal(keys[0], (target_vocab_size, d_model), jnp.float32),
        "pos_encoding": _sinusoidal_pe(maximum_position_encoding, d_model),
        "layers": [
            _init_decoder_layer(keys[i + 1], d_model, num_heads, dff, mha_hidden)
            for i in range(num_layers)
        ],
        "num_heads": num_heads,
    }


# ----------------------------------------------------------------------------
# Demo
# ----------------------------------------------------------------------------
if __name__ == "__main__":
    num_layers = 2
    d_model = 32
    num_heads = 4
    dff = 64
    vocab = 100
    max_pos = 64
    B, S_dec, S_enc = 2, 8, 8

    root = jax.random.PRNGKey(0)
    k_params, k_tok, k_enc = jax.random.split(root, 3)

    params = init_decoder(
        k_params, num_layers, d_model, num_heads, dff,
        mha_hidden=None, target_vocab_size=vocab,
        maximum_position_encoding=max_pos)

    tokens = jax.random.randint(k_tok, (B, S_dec), 0, vocab)
    enc_output = jax.random.normal(k_enc, (B, S_enc, d_model), jnp.float32)

    # causal look-ahead mask (1 = masked), per-query form (B, Sq, Sq)
    causal = (jnp.arange(S_dec)[:, None] < jnp.arange(S_dec)[None, :]).astype(jnp.float32)
    look_ahead_mask = jnp.broadcast_to(causal, (B, S_dec, S_dec))
    # padding mask: 1 = masked (reference convention, shape (B, S_enc))
    padding_mask = jnp.zeros((B, S_enc), jnp.float32).at[:, -1].set(1.0)

    out, attn_weights = decoder_forward(
        params, tokens, enc_output,
        look_ahead_mask=look_ahead_mask, padding_mask=padding_mask)

    jax.block_until_ready(out)
    for v in attn_weights.values():
        jax.block_until_ready(v)

    assert out.shape == (B, S_dec, d_model)
    assert attn_weights["decoder_layer1_block1"].shape == (B, num_heads, S_dec, S_dec)
    assert attn_weights["decoder_layer1_block2"].shape == (B, num_heads, S_dec, S_enc)
    assert bool(jnp.all(jnp.isfinite(out.astype(jnp.float32))))
    assert bool(jnp.all(jnp.isfinite(
        attn_weights["decoder_layer1_block1"].astype(jnp.float32))))
    print("KERNEL_OK")
</pallas_src>

<mosaic_0001>
module attributes {stable_mosaic.version = 11 : i64} {
  func.func @_matmul_kernel(%arg0: i32, %arg1: i32, %arg2: i32, %arg3: memref<16x32xbf16, #tpu.memory_space<vmem>>, %arg4: memref<32x96xbf16, #tpu.memory_space<vmem>>, %arg5: memref<1x96xf32, #tpu.memory_space<vmem>>, %arg6: memref<16x96xbf16, #tpu.memory_space<vmem>>, %arg7: memref<16x96xf32, #tpu.memory_space<vmem>>) attributes {dimension_semantics = [#tpu.dimension_semantics<parallel>, #tpu.dimension_semantics<parallel>, #tpu.dimension_semantics<arbitrary>], iteration_bounds = array<i64: 1, 1, 1>, scalar_prefetch = 0 : i64, scratch_operands = 1 : i64, tpu.core_type = #tpu.core_type<tc>, window_params = [{transform_indices = @transform_0, window_bounds = array<i64: 16, 32>}, {transform_indices = @transform_1, window_bounds = array<i64: 32, 96>}, {transform_indices = @transform_2, window_bounds = array<i64: 1, 96>}, {transform_indices = @transform_3, window_bounds = array<i64: 16, 96>}]} {
    %c0_i32 = arith.constant 0 : i32
    %0 = arith.cmpi eq, %arg2, %c0_i32 : i32
    %1 = arith.extui %0 : i1 to i32
    %c0_i32_0 = arith.constant 0 : i32
    %2 = arith.cmpi ne, %1, %c0_i32_0 : i32
    scf.if %2 {
      %cst_10 = arith.constant 0.000000e+00 : f32
      %12 = vector.broadcast %cst_10 : f32 to vector<16x96xf32>
      %c0_11 = arith.constant 0 : index
      %c0_12 = arith.constant 0 : index
      %13 = vector.load %arg7[%c0_11, %c0_12] : memref<16x96xf32, #tpu.memory_space<vmem>>, vector<16x96xf32>
      tpu.vector_store %arg7[%c0_11, %c0_12], %12 {strides = array<i32>} : memref<16x96xf32, #tpu.memory_space<vmem>>, vector<16x96xf32>,
    } else {
    }
    %c0 = arith.constant 0 : index
    %c0_1 = arith.constant 0 : index
    %3 = vector.load %arg7[%c0, %c0_1] : memref<16x96xf32, #tpu.memory_space<vmem>>, vector<16x96xf32>
    %c0_2 = arith.constant 0 : index
    %c0_3 = arith.constant 0 : index
    %4 = vector.load %arg3[%c0_2, %c0_3] : memref<16x32xbf16, #tpu.memory_space<vmem>>, vector<16x32xbf16>
    %c0_4 = arith.constant 0 : index
    %c0_5 = arith.constant 0 : index
    %5 = vector.load %arg4[%c0_4, %c0_5] : memref<32x96xbf16, #tpu.memory_space<vmem>>, vector<32x96xbf16>
    %cst = arith.constant dense<0.000000e+00> : vector<16x96xf32>
    %6 = tpu.matmul %4, %5, %cst {dimension_numbers = #tpu.dot_dimension_numbers<[1], [0], [0], [1], [0, 0, 1, 1], [], []>} : vector<16x32xbf16>, vector<32x96xbf16>, vector<16x96xf32> -> vector<16x96xf32>
    %7 = arith.addf %3, %6 : vector<16x96xf32>
    %c0_6 = arith.constant 0 : index
    %c0_7 = arith.constant 0 : index
    %8 = vector.load %arg7[%c0_6, %c0_7] : memref<16x96xf32, #tpu.memory_space<vmem>>, vector<16x96xf32>
    tpu.vector_store %arg7[%c0_6, %c0_7], %7 {strides = array<i32>} : memref<16x96xf32, #tpu.memory_space<vmem>>, vector<16x96xf32>,
    %c0_i32_8 = arith.constant 0 : i32
    %9 = arith.cmpi eq, %arg2, %c0_i32_8 : i32
    %10 = arith.extui %9 : i1 to i32
    %c0_i32_9 = arith.constant 0 : i32
    %11 = arith.cmpi ne, %10, %c0_i32_9 : i32
    scf.if %11 {
      %c0_10 = arith.constant 0 : index
      %c0_11 = arith.constant 0 : index
      %12 = vector.load %arg7[%c0_10, %c0_11] : memref<16x96xf32, #tpu.memory_space<vmem>>, vector<16x96xf32>
      %c0_12 = arith.constant 0 : index
      %c0_13 = arith.constant 0 : index
      %13 = vector.load %arg5[%c0_12, %c0_13] : memref<1x96xf32, #tpu.memory_space<vmem>>, vector<1x96xf32>
      %14 = vector.broadcast %13 : vector<1x96xf32> to vector<16x96xf32>
      %15 = arith.addf %12, %14 : vector<16x96xf32>
      %16 = arith.truncf %15 : vector<16x96xf32> to vector<16x96xbf16>
      %c0_14 = arith.constant 0 : index
      %c0_15 = arith.constant 0 : index
      %17 = vector.load %arg6[%c0_14, %c0_15] : memref<16x96xbf16, #tpu.memory_space<vmem>>, vector<16x96xbf16>
      tpu.vector_store %arg6[%c0_14, %c0_15], %16 {strides = array<i32>} : memref<16x96xbf16, #tpu.memory_space<vmem>>, vector<16x96xbf16>,
    } else {
    }
    return
  }
  func.func @transform_0(%arg0: i32, %arg1: i32, %arg2: i32) -> (i32, i32) {
    %c0_i32 = arith.constant 0 : i32
    return %arg0, %arg2 : i32, i32
  }
  func.func @transform_1(%arg0: i32, %arg1: i32, %arg2: i32) -> (i32, i32) {
    %c0_i32 = arith.constant 0 : i32
    return %arg2, %arg1 : i32, i32
  }
  func.func @transform_2(%arg0: i32, %arg1: i32, %arg2: i32) -> (i32, i32) {
    %c0_i32 = arith.constant 0 : i32
    %c0_i32_0 = arith.constant 0 : i32
    return %c0_i32, %arg1 : i32, i32
  }
  func.func @transform_3(%arg0: i32, %arg1: i32, %arg2: i32) -> (i32, i32) {
    %c0_i32 = arith.constant 0 : i32
    return %arg0, %arg1 : i32, i32
  }
}

</mosaic_0001>

<llo_original>
// kernel: tpu_custom_call.1
$region0: #{tpu_custom_call.1}
  #allocation0 [shape = 'u32[]', space=smem, size = 0x4, offset = 0x4, fixed_abs, tag = 'smem constant byte address 0x4 - core index']
  #allocation1 [shape = 'u32[144,128]{1,0:T(1,128)}', space=vmem, size = 0x12000, scoped, tag = 'internal scratch']
  #allocation2 [shape = 'f32[16,96]{1,0:T(8,128)}', space=vmem, size = 0x2000, scoped, tag = 'scratch operand']
  %s0 = inlined_call_operand.hbm [shape: bf16[16,32], index: 0, kind: input, shape index: {}]
  %s1 = inlined_call_operand.hbm [shape: bf16[32,96], index: 1, kind: input, shape index: {}]
  %s2 = inlined_call_operand.vmem [shape: f32[1,96], index: 2, kind: input, shape index: {}]
  %s3 = inlined_call_operand.hbm [shape: bf16[16,96], index: 3, kind: output, shape index: {}]
  %s4 = sld [smem:[#allocation0]]
  $region38: #{tpu_custom_call.1} parent=0
    _
  %s6 = ssub.s32 1, %s4
  %s7 = scalar_select 0, %s6, %s4
  $region1: #{tpu_custom_call.1} parent=0
    #allocation3 [shape = 'u8[4096]{0}', space=vmem, size = 0x1000, scoped, tag = 'input window, operand 0, single buffered']
    #allocation4 [shape = 's32[1]{0}', space=sflag, size = 0x4, scoped, tag = 'scoped memory for tpu_custom_call.1']
    #allocation5 [shape = 's32[1]{0}', space=sflag, size = 0x4, scoped, tag = 'scoped memory for tpu_custom_call.1']
    #allocation6 [shape = 'u8[8192]{0}', space=vmem, size = 0x2000, scoped, tag = 'input window, operand 1, single buffered']
    #allocation7 [shape = 's32[1]{0}', space=sflag, size = 0x4, scoped, tag = 'scoped memory for tpu_custom_call.1']
    #allocation8 [shape = 'u8[4096]{0}', space=vmem, size = 0x1000, scoped, tag = 'output window, operand 0, single buffered']
    %8 = vsyncpa [#allocation4], 0
    %9 = vsyncpa [#allocation7], 0
    %10 = vsyncpa [#allocation5], 0
    // Predicated region
    $region2: #{tpu_custom_call.1} parent=1 // pred_check
      _
    $region3: #{tpu_custom_call.1} parent=1 // pred_check_branch
      %12 = sbr.rel (0) target = $region5
    $region4: #{tpu_custom_call.1} parent=1 // pred_region
      %s14 = ssub.s32 128, 128
      %15 = vsyncadd [#allocation4], %s14
      %s16 = sshll.u32 [#allocation3], 4
      %s17 = int_to_ptr.vmem [resolvable:$true] %s16
      %22 = dma.hbm_to_vmem [thread:$0]  %s0, 128, %s17, [#allocation4], 64, 64, 4
    $region5: #{tpu_custom_call.1} parent=1 // pred_fallthru
      _
    // Predicated region
    $region6: #{tpu_custom_call.1} parent=1 // pred_check
      _
    $region7: #{tpu_custom_call.1} parent=1 // pred_check_branch
      %24 = sbr.rel (0) target = $region9
    $region8: #{tpu_custom_call.1} parent=1 // pred_region
      %s26 = ssub.s32 256, 256
      %27 = vsyncadd [#allocation7], %s26
      %s28 = sshll.u32 [#allocation6], 4
      %s29 = int_to_ptr.vmem [resolvable:$true] %s28
      %34 = dma.hbm_to_vmem [thread:$0]  %s1, 256, %s29, [#allocation7], 64, 64, 4
    $region9: #{tpu_custom_call.1} parent=1 // pred_fallthru
      _
    // Predicated region
    $region10: #{tpu_custom_call.1} parent=1 // pred_check
      _
    $region11: #{tpu_custom_call.1} parent=1 // pred_check_branch
      %36 = sbr.rel (0) target = $region13
    $region12: #{tpu_custom_call.1} parent=1 // pred_region
      _
    $region13: #{tpu_custom_call.1} parent=1 // pred_fallthru
      _
    // Predicated region
    $region14: #{tpu_custom_call.1} parent=1 // pred_check
      _
    $region15: #{tpu_custom_call.1} parent=1 // pred_check_branch
      %38 = sbr.rel (0) target = $region17
    $region16: #{tpu_custom_call.1} parent=1 // pred_region
      %39 = dma.done [#allocation4], 128
    $region17: #{tpu_custom_call.1} parent=1 // pred_fallthru
      _
    // Predicated region
    $region18: #{tpu_custom_call.1} parent=1 // pred_check
      _
    $region19: #{tpu_custom_call.1} parent=1 // pred_check_branch
      %41 = sbr.rel (0) target = $region21
    $region20: #{tpu_custom_call.1} parent=1 // pred_region
      %42 = dma.done [#allocation7], 256
    $region21: #{tpu_custom_call.1} parent=1 // pred_fallthru
      _
    %p44 = scmp.eq.s32.totalorder 0, 0
    // Predicated region
    $region22: #{tpu_custom_call.1} parent=1 // pred_check
      %p45 = pneg %p44
    $region23: #{tpu_custom_call.1} parent=1 // pred_check_branch
      %47 = sbr.rel (%p45) target = $region25
    $region24: #{tpu_custom_call.1} parent=1 // pred_region
      %vm48 = vcmask 785408
      %49 = vst.msk [vmem:[#allocation2] sm:$0xff] %vm48, 0.0
      %50 = vst.msk [vmem:[#allocation2 + $0x8] sm:$0xff] %vm48, 0.0
    $region25: #{tpu_custom_call.1} parent=1 // pred_fallthru
      _
    %v51 = vld [vmem:[#allocation2] sm:$0xff]
    %v52 = vld [vmem:[#allocation2 + $0x8] sm:$0xff]
    %v53 = vld [vmem:[#allocation3] sm:$0xf]
    %v54 = vld [vmem:[#allocation3 + $0x4] sm:$0xf]
    %v55 = vld [vmem:[#allocation6] sm:$0xf]
    %v56 = vld [vmem:[#allocation6 + $0x4] sm:$0xf]
    %v57 = vld [vmem:[#allocation6 + $0x8] sm:$0xf]
    %v58 = vld [vmem:[#allocation6 + $0xc] sm:$0xf]
    %v61 = vunpack.c.l.b16 %v53
    %v62 = vunpack.c.l.b16 %v54
    %v63 = vpack.c.b16 %v62, %v61
    %v68 = vunpack.c.l.b16 %v55
    %v69 = vunpack.c.l.b16 %v56
    %v70 = vunpack.c.l.b16 %v57
    %v71 = vunpack.c.l.b16 %v58
    %v72 = vpack.c.b16 %v69, %v68
    %v73 = vpack.c.b16 %v71, %v70
    %vm76 = vcmask 261120
    %v78 = vsel %vm76, %v63, 0
    %80 = vmatprep.subr.bf16.mxu0 0
    %81 = vmatpush1.bf16.msra.mxu0 %v72
    %82 = vmatprep.subr.bf16.mxu0 0
    %83 = vmatpush1.bf16.msra.mxu0 %v73
    %84 = vmatprep.subr.bf16.mxu0 0
    %85 = vmatpush1.bf16.msra.mxu0 0
    %86 = vmatprep.subr.bf16.mxu0 0
    %87 = vmatpush1.bf16.msra.mxu0 0
    %88 = vmatprep.subr.bf16.mxu0 0
    %89 = vmatpush1.bf16.msra.mxu0 0
    %90 = vmatprep.subr.bf16.mxu0 0
    %91 = vmatpush1.bf16.msra.mxu0 0
    %92 = vmatprep.subr.bf16.mxu0 0
    %93 = vmatpush1.bf16.msra.mxu0 0
    %94 = vmatprep.subr.bf16.mxu0 0
    %95 = vmatpush1.bf16.msra.mxu0 0
    %96 = vmatprep.subr.bf16.mxu0 0
    %97 = vmatpush1.bf16.msra.mxu0 0
    %98 = vmatprep.subr.bf16.mxu0 0
    %99 = vmatpush1.bf16.msra.mxu0 0
    %100 = vmatprep.subr.bf16.mxu0 0
    %101 = vmatpush1.bf16.msra.mxu0 0
    %102 = vmatprep.subr.bf16.mxu0 0
    %103 = vmatpush1.bf16.msra.mxu0 0
    %104 = vmatprep.subr.bf16.mxu0 0
    %105 = vmatpush1.bf16.msra.mxu0 0
    %106 = vmatprep.subr.bf16.mxu0 0
    %107 = vmatpush1.bf16.msra.mxu0 0
    %108 = vmatprep.subr.bf16.mxu0 0
    %109 = vmatpush1.bf16.msra.mxu0 0
    %110 = vmatprep.subr.bf16.mxu0 0
    %111 = vmatpush1.bf16.msra.mxu0 0
    %112 = vmatprep.mubr.bf16.mxu0 0
    %113 = vmatmul.mubr.bf16.gmra.mrb[0].mxu0 %v78
    %v114 = vpop.f32.mrb[0].mxu0
    %v115 = vadd.f32 0.0, %v114
    %v116 = vpop.f32.mrb[0].mxu0
    %v117 = vpop.f32.mrb[0].mxu0
    %v118 = vadd.f32 0.0, %v117
    %v119 = vpop.f32.mrb[0].mxu0
    %120 = vdwg.mxu0
    %v121 = vadd.f32 %v51, %v115
    %v122 = vadd.f32 %v52, %v118
    %vm123 = vcmask 785408
    %124 = vst.msk [vmem:[#allocation2] sm:$0xff] %vm123, %v121
    %125 = vst.msk [vmem:[#allocation2 + $0x8] sm:$0xff] %vm123, %v122
    // Predicated region
    $region26: #{tpu_custom_call.1} parent=1 // pred_check
      %p126 = pneg %p44
    $region27: #{tpu_custom_call.1} parent=1 // pred_check_branch
      %128 = sbr.rel (%p126) target = $region29
    $region28: #{tpu_custom_call.1} parent=1 // pred_region
      %v129 = vld [vmem:[#allocation2] sm:$0xff]
      %v130 = vld [vmem:[#allocation2 + $0x8] sm:$0xff]
      %v131 = vld [vmem:[%s2] sm:$0x1]
      %v133 = vlaneseq
      %v134 = vshrl.u32 %v133, 7
      %v135 = vsub.s32 0, %v134
      %v136 = vrot.slane %v131, %v135
      %v138 = vadd.f32 %v129, %v136
      %v139 = vadd.f32 %v130, %v136
      %v140 = vpack.c.bf16 %v139, %v138
      %v142 = vunpack.c.l.b16 %v140
      %v143 = vunpack.c.h.b16 %v140
      %v144 = vpack.c.b16 %v142, %v142
      %v145 = vpack.c.b16 %v143, %v143
      %vm148 = vcmask 781312
      %149 = vst.msk [vmem:[#allocation8] sm:$0xf] %vm148, %v144
      %150 = vst.msk [vmem:[#allocation8 + $0x4] sm:$0xf] %vm148, %v145
    $region29: #{tpu_custom_call.1} parent=1 // pred_fallthru
      _
    // Predicated region
    $region30: #{tpu_custom_call.1} parent=1 // pred_check
      _
    $region31: #{tpu_custom_call.1} parent=1 // pred_check_branch
      %152 = sbr.rel (0) target = $region33
    $region32: #{tpu_custom_call.1} parent=1 // pred_region
      %s154 = ssub.s32 128, 128
      %155 = vsyncadd [#allocation5], %s154
      %s156 = sshll.u32 [#allocation8], 4
      %s157 = int_to_ptr.vmem [resolvable:$true] %s156
      %162 = dma.vmem_to_hbm [thread:$0]  %s157, 128, %s3, [#allocation5], 64, 64, 4
    $region33: #{tpu_custom_call.1} parent=1 // pred_fallthru
      _
    // Predicated region
    $region34: #{tpu_custom_call.1} parent=1 // pred_check
      _
    $region35: #{tpu_custom_call.1} parent=1 // pred_check_branch
      %164 = sbr.rel (0) target = $region37
    $region36: #{tpu_custom_call.1} parent=1 // pred_region
      %165 = dma.done [#allocation5], 128
    $region37: #{tpu_custom_call.1} parent=1 // pred_fallthru
      _
    %166 = vsyncpa [#allocation4], 1
    %167 = vsyncpa [#allocation7], 1
    %168 = vsyncpa [#allocation5], 1

</llo_original>
